<compile_context>
chip_gen: v6e
topology: v6e:2x2x1
jax: 0.10.0
libtpu: 0.0.40
codegen_flags: <defaults>
</compile_context>

<pallas_src>
import math
import functools

import jax
import jax.numpy as jnp
from jax import lax
from jax.experimental import pallas as pl
from jax.experimental.pallas import tpu as pltpu

DEGREE = 5
KNOTS = (1.0 / 3.0, 2.0 / 3.0)
NUM_BASIS = DEGREE + 1 + len(KNOTS)  # 8


def _round_up(a, m):
    return ((a + m - 1) // m) * m


def _spline_cols(t):
    """List of NUM_BASIS truncated-power basis columns for t of shape [B,1]."""
    cols = [jnp.ones_like(t), t]
    tp = t
    for _ in range(DEGREE - 1):          # t^2 .. t^DEGREE, incremental powers
        tp = tp * t
        cols.append(tp)
    for knot in KNOTS:
        d = jnp.maximum(t - knot, 0.0)
        cols.append(d ** DEGREE)
    return cols


def cross_attention_kernel(t_ref, xres_ref, xkv_ref, wqT_ref, bq_ref,
                           wkT_ref, bk_ref, wvT_ref, bv_ref, wfcT_ref, bfc_ref,
                           o_ref,
                           q_scr, m_scr, l_scr, acc_scr,
                           *, hidden_dim, seq_len, tkv, need_mask):
    ki = pl.program_id(1)
    nk = pl.num_programs(1)

    # ---- init per query tile: build Q once, reset online-softmax state ----
    @pl.when(ki == 0)
    def _init():
        t = t_ref[...]                                   # (TQ, 1) f32
        cols = _spline_cols(t)
        wq = wqT_ref[...]                                # (NUM_BASIS, H) f32 (scale folded)
        tq = t.shape[0]
        q = jnp.broadcast_to(bq_ref[...], (tq, hidden_dim))
        for j in range(NUM_BASIS):                       # sublane row broadcast, VPU
            q = q + cols[j] * wq[j:j + 1, :]
        q_scr[...] = q.astype(jnp.bfloat16)
        m_scr[...] = jnp.full_like(m_scr, -jnp.inf)
        l_scr[...] = jnp.zeros_like(l_scr)
        acc_scr[...] = jnp.zeros_like(acc_scr)

    # ---- K / V projections for this KV tile (bf16 MXU, f32 accumulate) ----
    x_kv = xkv_ref[...]                                  # (TKV, D) bf16
    k = jnp.dot(x_kv, wkT_ref[...], preferred_element_type=jnp.float32) + bk_ref[...]
    v = jnp.dot(x_kv, wvT_ref[...], preferred_element_type=jnp.float32) + bv_ref[...]

    # scores = (Q / sqrt(H)) @ K^T   (scale already folded into Q weights)
    scores = lax.dot_general(q_scr[...], k.astype(jnp.bfloat16),
                             (((1,), (1,)), ((), ())),
                             preferred_element_type=jnp.float32)   # (TQ, TKV)
    if need_mask:
        col = ki * tkv + lax.broadcasted_iota(jnp.int32, scores.shape, 1)
        scores = jnp.where(col < seq_len, scores, -jnp.inf)

    # ---- online softmax update (f32) ----
    m_prev = m_scr[...]
    m_new = jnp.maximum(m_prev, jnp.max(scores, axis=-1, keepdims=True))
    alpha = jnp.exp(m_prev - m_new)
    p = jnp.exp(scores - m_new)
    l_scr[...] = alpha * l_scr[...] + jnp.sum(p, axis=-1, keepdims=True)
    acc_scr[...] = alpha * acc_scr[...] + jnp.dot(
        p.astype(jnp.bfloat16), v.astype(jnp.bfloat16),
        preferred_element_type=jnp.float32)
    m_scr[...] = m_new

    # ---- finalize: normalize, residual, output projection ----
    @pl.when(ki == nk - 1)
    def _finalize():
        inv_l = pl.reciprocal(l_scr[...], approx=True)
        out = acc_scr[...] * inv_l + xres_ref[...]       # (TQ, H) f32 residual
        o_ref[...] = jnp.dot(out.astype(jnp.bfloat16), wfcT_ref[...],
                             preferred_element_type=jnp.float32) + bfc_ref[...]


def cross_attention(x, t, params, *, tile=256):
    B, D = x.shape
    H = params["wqT"].shape[1]
    out_dim = params["wfcT"].shape[1]
    assert D == H, "residual `attn @ V + x` requires input_dim == hidden_dim"

    # Tile size: multiple of 8 sublanes, clamped to (padded) batch.
    T = min(_round_up(tile, 8), _round_up(B, 8))
    B_pad = _round_up(B, T)
    out_pad = _round_up(out_dim, 128)          # lane-dense output stores
    need_mask = B_pad != B

    # Fold 1/sqrt(H) into the query projection (free at trace time).
    scale = 1.0 / math.sqrt(H)
    wqT = (params["wqT"] * scale).astype(jnp.float32)
    bq = (params["bq"] * scale).astype(jnp.float32)
    wkT = params["wkT"].astype(jnp.bfloat16)
    wvT = params["wvT"].astype(jnp.bfloat16)
    bk = params["bk"].astype(jnp.float32)
    bv = params["bv"].astype(jnp.float32)
    wfcT = jnp.zeros((H, out_pad), jnp.bfloat16).at[:, :out_dim].set(
        params["wfcT"].astype(jnp.bfloat16))
    bfc = jnp.zeros((1, out_pad), jnp.float32).at[:, :out_dim].set(
        params["bfc"].astype(jnp.float32))

    x_f32 = x.astype(jnp.float32)
    t_f32 = t.astype(jnp.float32)
    if need_mask:
        x_f32 = jnp.pad(x_f32, ((0, B_pad - B), (0, 0)))
        t_f32 = jnp.pad(t_f32, ((0, B_pad - B), (0, 0)))
    x_bf = x_f32.astype(jnp.bfloat16)          # KV-side (halves DMA bytes)

    nq = B_pad // T
    nkv = B_pad // T

    kernel = functools.partial(cross_attention_kernel, hidden_dim=H,
                               seq_len=B, tkv=T, need_mask=need_mask)

    const = lambda qi, ki: (0, 0)              # params: DMA'd once, stay resident
    grid_spec = pltpu.PrefetchScalarGridSpec(
        num_scalar_prefetch=0,
        grid=(nq, nkv),
        in_specs=[
            pl.BlockSpec((T, 1), lambda qi, ki: (qi, 0)),        # t
            pl.BlockSpec((T, D), lambda qi, ki: (qi, 0)),        # x (f32, residual)
            pl.BlockSpec((T, D), lambda qi, ki: (ki, 0)),        # x (bf16, KV side)
            pl.BlockSpec((NUM_BASIS, H), const),                 # wqT
            pl.BlockSpec((1, H), const),                         # bq
            pl.BlockSpec((D, H), const),                         # wkT
            pl.BlockSpec((1, H), const),                         # bk
            pl.BlockSpec((D, H), const),                         # wvT
            pl.BlockSpec((1, H), const),                         # bv
            pl.BlockSpec((H, out_pad), const),                   # wfcT (padded)
            pl.BlockSpec((1, out_pad), const),                   # bfc (padded)
        ],
        out_specs=pl.BlockSpec((T, out_pad), lambda qi, ki: (qi, 0)),
        scratch_shapes=[
            pltpu.VMEM((T, H), jnp.bfloat16),   # Q tile
            pltpu.VMEM((T, 1), jnp.float32),    # m (running max)
            pltpu.VMEM((T, 1), jnp.float32),    # l (running denom)
            pltpu.VMEM((T, H), jnp.float32),    # acc (unnormalized out)
        ],
    )

    out = pl.pallas_call(
        kernel,
        out_shape=jax.ShapeDtypeStruct((B_pad, out_pad), jnp.float32),
        grid_spec=grid_spec,
        compiler_params=pltpu.CompilerParams(
            dimension_semantics=("parallel", "arbitrary"),
            vmem_limit_bytes=48 * 1024 * 1024,   # headroom for v7x's 64 MiB VMEM
        ),
    )(t_f32, x_f32, x_bf, wqT, bq, wkT, bk, wvT, bv, wfcT, bfc)

    return out[:B, :out_dim]


def init_params(key, input_dim, hidden_dim, output_dim):
    """Deterministic PyTorch-Linear-style init; weights pre-transposed [in,out]."""
    def linear(k, in_d, out_d):
        kw, kb = jax.random.split(k)
        bound = 1.0 / math.sqrt(in_d)
        w = jax.random.uniform(kw, (out_d, in_d), jnp.float32, -bound, bound)
        b = jax.random.uniform(kb, (1, out_d), jnp.float32, -bound, bound)
        return w.T, b

    kq, kk, kv, kf = jax.random.split(key, 4)
    wqT, bq = linear(kq, NUM_BASIS, hidden_dim)
    wkT, bk = linear(kk, input_dim, hidden_dim)
    wvT, bv = linear(kv, input_dim, hidden_dim)
    wfcT, bfc = linear(kf, hidden_dim, output_dim)
    return {"wqT": wqT, "bq": bq, "wkT": wkT, "bk": bk,
            "wvT": wvT, "bv": bv, "wfcT": wfcT, "bfc": bfc}


def reference(x, t, params):
    """Pure-JAX f32 reference mirroring the PyTorch forward."""
    H = params["wqT"].shape[1]
    basis = jnp.concatenate(_spline_cols(t), axis=-1)
    Q = basis @ params["wqT"] + params["bq"]
    K = x @ params["wkT"] + params["bk"]
    V = x @ params["wvT"] + params["bv"]
    scores = (Q @ K.T) / math.sqrt(H)
    attn = jax.nn.softmax(scores, axis=-1)
    out = attn @ V + x
    return out @ params["wfcT"] + params["bfc"]


if __name__ == "__main__":
    # B not a multiple of the tile -> exercises tiling + KV masking paths.
    B, D, H, OUT = 20, 16, 16, 1   # input_dim must equal hidden_dim (residual add)
    key = jax.random.PRNGKey(0)
    kx, kt, kp = jax.random.split(key, 3)

    x = jax.random.normal(kx, (B, D), dtype=jnp.float32)
    t = jax.random.uniform(kt, (B, 1), dtype=jnp.float32)   # t assumed in [0, 1]
    params = init_params(kp, D, H, OUT)

    out = cross_attention(x, t, params, tile=8)              # grid = (3, 3)
    jax.block_until_ready(out)

    ref = reference(x, t, params)
    assert out.shape == (B, OUT)
    # bf16 MXU inputs + approx reciprocal -> looser tolerance than pure f32.
    assert jnp.allclose(out, ref, atol=5e-2, rtol=5e-2), "mismatch vs reference"
    print("KERNEL_OK")
</pallas_src>

<mosaic_0001>
module attributes {stable_mosaic.version = 11 : i64} {
  func.func @cross_attention_kernel(%arg0: i32, %arg1: i32, %arg2: memref<8x1xf32, #tpu.memory_space<vmem>>, %arg3: memref<8x16xf32, #tpu.memory_space<vmem>>, %arg4: memref<8x16xbf16, #tpu.memory_space<vmem>>, %arg5: memref<8x16xf32, #tpu.memory_space<vmem>>, %arg6: memref<1x16xf32, #tpu.memory_space<vmem>>, %arg7: memref<16x16xbf16, #tpu.memory_space<vmem>>, %arg8: memref<1x16xf32, #tpu.memory_space<vmem>>, %arg9: memref<16x16xbf16, #tpu.memory_space<vmem>>, %arg10: memref<1x16xf32, #tpu.memory_space<vmem>>, %arg11: memref<16x128xbf16, #tpu.memory_space<vmem>>, %arg12: memref<1x128xf32, #tpu.memory_space<vmem>>, %arg13: memref<8x128xf32, #tpu.memory_space<vmem>>, %arg14: memref<8x16xbf16, #tpu.memory_space<vmem>>, %arg15: memref<8x1xf32, #tpu.memory_space<vmem>>, %arg16: memref<8x1xf32, #tpu.memory_space<vmem>>, %arg17: memref<8x16xf32, #tpu.memory_space<vmem>>) attributes {dimension_semantics = [#tpu.dimension_semantics<parallel>, #tpu.dimension_semantics<arbitrary>], iteration_bounds = array<i64: 3, 3>, scalar_prefetch = 0 : i64, scratch_operands = 4 : i64, tpu.core_type = #tpu.core_type<tc>, window_params = [{transform_indices = @transform_0, window_bounds = array<i64: 8, 1>}, {transform_indices = @transform_1, window_bounds = array<i64: 8, 16>}, {transform_indices = @transform_2, window_bounds = array<i64: 8, 16>}, {pipeline_mode = #tpu.pipeline_mode<synchronous>, transform_indices = @transform_3, window_bounds = array<i64: 8, 16>}, {pipeline_mode = #tpu.pipeline_mode<synchronous>, transform_indices = @transform_4, window_bounds = array<i64: 1, 16>}, {pipeline_mode = #tpu.pipeline_mode<synchronous>, transform_indices = @transform_5, window_bounds = array<i64: 16, 16>}, {pipeline_mode = #tpu.pipeline_mode<synchronous>, transform_indices = @transform_6, window_bounds = array<i64: 1, 16>}, {pipeline_mode = #tpu.pipeline_mode<synchronous>, transform_indices = @transform_7, window_bounds = array<i64: 16, 16>}, {pipeline_mode = #tpu.pipeline_mode<synchronous>, transform_indices = @transform_8, window_bounds = array<i64: 1, 16>}, {pipeline_mode = #tpu.pipeline_mode<synchronous>, transform_indices = @transform_9, window_bounds = array<i64: 16, 128>}, {pipeline_mode = #tpu.pipeline_mode<synchronous>, transform_indices = @transform_10, window_bounds = array<i64: 1, 128>}, {transform_indices = @transform_11, window_bounds = array<i64: 8, 128>}]} {
    %c0_i32 = arith.constant 0 : i32
    %0 = arith.cmpi eq, %arg1, %c0_i32 : i32
    %1 = arith.extui %0 : i1 to i32
    %c0_i32_0 = arith.constant 0 : i32
    %2 = arith.cmpi ne, %1, %c0_i32_0 : i32
    scf.if %2 {
      %c0_31 = arith.constant 0 : index
      %c0_32 = arith.constant 0 : index
      %52 = vector.load %arg2[%c0_31, %c0_32] : memref<8x1xf32, #tpu.memory_space<vmem>>, vector<8x1xf32>
      %cst_33 = arith.constant 1.000000e+00 : f32
      %53 = vector.broadcast %cst_33 : f32 to vector<8x1xf32>
      %54 = arith.mulf %52, %52 : vector<8x1xf32>
      %55 = arith.mulf %54, %52 : vector<8x1xf32>
      %56 = arith.mulf %55, %52 : vector<8x1xf32>
      %57 = arith.mulf %56, %52 : vector<8x1xf32>
      %cst_34 = arith.constant 0.333333343 : f32
      %58 = vector.broadcast %cst_34 : f32 to vector<8x1xf32>
      %59 = arith.subf %52, %58 : vector<8x1xf32>
      %cst_35 = arith.constant 0.000000e+00 : f32
      %60 = vector.broadcast %cst_35 : f32 to vector<8x1xf32>
      %61 = arith.maximumf %59, %60 : vector<8x1xf32>
      %62 = arith.mulf %61, %61 : vector<8x1xf32>
      %63 = arith.mulf %62, %62 : vector<8x1xf32>
      %64 = arith.mulf %61, %63 : vector<8x1xf32>
      %cst_36 = arith.constant 0.666666686 : f32
      %65 = vector.broadcast %cst_36 : f32 to vector<8x1xf32>
      %66 = arith.subf %52, %65 : vector<8x1xf32>
      %cst_37 = arith.constant 0.000000e+00 : f32
      %67 = vector.broadcast %cst_37 : f32 to vector<8x1xf32>
      %68 = arith.maximumf %66, %67 : vector<8x1xf32>
      %69 = arith.mulf %68, %68 : vector<8x1xf32>
      %70 = arith.mulf %69, %69 : vector<8x1xf32>
      %71 = arith.mulf %68, %70 : vector<8x1xf32>
      %c0_38 = arith.constant 0 : index
      %c0_39 = arith.constant 0 : index
      %72 = vector.load %arg5[%c0_38, %c0_39] : memref<8x16xf32, #tpu.memory_space<vmem>>, vector<8x16xf32>
      %c0_40 = arith.constant 0 : index
      %c0_41 = arith.constant 0 : index
      %73 = vector.load %arg6[%c0_40, %c0_41] : memref<1x16xf32, #tpu.memory_space<vmem>>, vector<1x16xf32>
      %74 = vector.shape_cast %73 : vector<1x16xf32> to vector<1x16xf32>
      %75 = vector.broadcast %74 : vector<1x16xf32> to vector<8x16xf32>
      %76 = vector.extract_strided_slice %72 {offsets = [0, 0], sizes = [1, 16], strides = [1, 1]} : vector<8x16xf32> to vector<1x16xf32>
      %77 = vector.broadcast %53 : vector<8x1xf32> to vector<8x16xf32>
      %78 = vector.broadcast %76 : vector<1x16xf32> to vector<8x16xf32>
      %79 = arith.mulf %77, %78 : vector<8x16xf32>
      %80 = arith.addf %75, %79 : vector<8x16xf32>
      %81 = vector.extract_strided_slice %72 {offsets = [1, 0], sizes = [1, 16], strides = [1, 1]} : vector<8x16xf32> to vector<1x16xf32>
      %82 = vector.broadcast %52 : vector<8x1xf32> to vector<8x16xf32>
      %83 = vector.broadcast %81 : vector<1x16xf32> to vector<8x16xf32>
      %84 = arith.mulf %82, %83 : vector<8x16xf32>
      %85 = arith.addf %80, %84 : vector<8x16xf32>
      %86 = vector.extract_strided_slice %72 {offsets = [2, 0], sizes = [1, 16], strides = [1, 1]} : vector<8x16xf32> to vector<1x16xf32>
      %87 = vector.broadcast %54 : vector<8x1xf32> to vector<8x16xf32>
      %88 = vector.broadcast %86 : vector<1x16xf32> to vector<8x16xf32>
      %89 = arith.mulf %87, %88 : vector<8x16xf32>
      %90 = arith.addf %85, %89 : vector<8x16xf32>
      %91 = vector.extract_strided_slice %72 {offsets = [3, 0], sizes = [1, 16], strides = [1, 1]} : vector<8x16xf32> to vector<1x16xf32>
      %92 = vector.broadcast %55 : vector<8x1xf32> to vector<8x16xf32>
      %93 = vector.broadcast %91 : vector<1x16xf32> to vector<8x16xf32>
      %94 = arith.mulf %92, %93 : vector<8x16xf32>
      %95 = arith.addf %90, %94 : vector<8x16xf32>
      %96 = vector.extract_strided_slice %72 {offsets = [4, 0], sizes = [1, 16], strides = [1, 1]} : vector<8x16xf32> to vector<1x16xf32>
      %97 = vector.broadcast %56 : vector<8x1xf32> to vector<8x16xf32>
      %98 = vector.broadcast %96 : vector<1x16xf32> to vector<8x16xf32>
      %99 = arith.mulf %97, %98 : vector<8x16xf32>
      %100 = arith.addf %95, %99 : vector<8x16xf32>
      %101 = vector.extract_strided_slice %72 {offsets = [5, 0], sizes = [1, 16], strides = [1, 1]} : vector<8x16xf32> to vector<1x16xf32>
      %102 = vector.broadcast %57 : vector<8x1xf32> to vector<8x16xf32>
      %103 = vector.broadcast %101 : vector<1x16xf32> to vector<8x16xf32>
      %104 = arith.mulf %102, %103 : vector<8x16xf32>
      %105 = arith.addf %100, %104 : vector<8x16xf32>
      %106 = vector.extract_strided_slice %72 {offsets = [6, 0], sizes = [1, 16], strides = [1, 1]} : vector<8x16xf32> to vector<1x16xf32>
      %107 = vector.broadcast %64 : vector<8x1xf32> to vector<8x16xf32>
      %108 = vector.broadcast %106 : vector<1x16xf32> to vector<8x16xf32>
      %109 = arith.mulf %107, %108 : vector<8x16xf32>
      %110 = arith.addf %105, %109 : vector<8x16xf32>
      %111 = vector.extract_strided_slice %72 {offsets = [7, 0], sizes = [1, 16], strides = [1, 1]} : vector<8x16xf32> to vector<1x16xf32>
      %112 = vector.broadcast %71 : vector<8x1xf32> to vector<8x16xf32>
      %113 = vector.broadcast %111 : vector<1x16xf32> to vector<8x16xf32>
      %114 = arith.mulf %112, %113 : vector<8x16xf32>
      %115 = arith.addf %110, %114 : vector<8x16xf32>
      %116 = arith.truncf %115 : vector<8x16xf32> to vector<8x16xbf16>
      %c0_42 = arith.constant 0 : index
      %c0_43 = arith.constant 0 : index
      %117 = vector.load %arg14[%c0_42, %c0_43] : memref<8x16xbf16, #tpu.memory_space<vmem>>, vector<8x16xbf16>
      tpu.vector_store %arg14[%c0_42, %c0_43], %116 {strides = array<i32>} : memref<8x16xbf16, #tpu.memory_space<vmem>>, vector<8x16xbf16>,
      %cst_44 = arith.constant 0xFF800000 : f32
      %118 = vector.broadcast %cst_44 : f32 to vector<8x1xf32>
      %c0_45 = arith.constant 0 : index
      %c0_46 = arith.constant 0 : index
      %119 = vector.load %arg15[%c0_45, %c0_46] : memref<8x1xf32, #tpu.memory_space<vmem>>, vector<8x1xf32>
      tpu.vector_store %arg15[%c0_45, %c0_46], %118 {strides = array<i32>} : memref<8x1xf32, #tpu.memory_space<vmem>>, vector<8x1xf32>,
      %cst_47 = arith.constant 0.000000e+00 : f32
      %120 = vector.broadcast %cst_47 : f32 to vector<8x1xf32>
      %c0_48 = arith.constant 0 : index
      %c0_49 = arith.constant 0 : index
      %121 = vector.load %arg16[%c0_48, %c0_49] : memref<8x1xf32, #tpu.memory_space<vmem>>, vector<8x1xf32>
      tpu.vector_store %arg16[%c0_48, %c0_49], %120 {strides = array<i32>} : memref<8x1xf32, #tpu.memory_space<vmem>>, vector<8x1xf32>,
      %cst_50 = arith.constant 0.000000e+00 : f32
      %122 = vector.broadcast %cst_50 : f32 to vector<8x16xf32>
      %c0_51 = arith.constant 0 : index
      %c0_52 = arith.constant 0 : index
      %123 = vector.load %arg17[%c0_51, %c0_52] : memref<8x16xf32, #tpu.memory_space<vmem>>, vector<8x16xf32>
      tpu.vector_store %arg17[%c0_51, %c0_52], %122 {strides = array<i32>} : memref<8x16xf32, #tpu.memory_space<vmem>>, vector<8x16xf32>,
    } else {
    }
    %c0 = arith.constant 0 : index
    %c0_1 = arith.constant 0 : index
    %3 = vector.load %arg4[%c0, %c0_1] : memref<8x16xbf16, #tpu.memory_space<vmem>>, vector<8x16xbf16>
    %c0_2 = arith.constant 0 : index
    %c0_3 = arith.constant 0 : index
    %4 = vector.load %arg7[%c0_2, %c0_3] : memref<16x16xbf16, #tpu.memory_space<vmem>>, vector<16x16xbf16>
    %cst = arith.constant dense<0.000000e+00> : vector<8x16xf32>
    %5 = tpu.matmul %3, %4, %cst {dimension_numbers = #tpu.dot_dimension_numbers<[1], [0], [0], [1], [0, 0, 1, 1], [], []>} : vector<8x16xbf16>, vector<16x16xbf16>, vector<8x16xf32> -> vector<8x16xf32>
    %c0_4 = arith.constant 0 : index
    %c0_5 = arith.constant 0 : index
    %6 = vector.load %arg8[%c0_4, %c0_5] : memref<1x16xf32, #tpu.memory_space<vmem>>, vector<1x16xf32>
    %7 = vector.broadcast %6 : vector<1x16xf32> to vector<8x16xf32>
    %8 = arith.addf %5, %7 : vector<8x16xf32>
    %c0_6 = arith.constant 0 : index
    %c0_7 = arith.constant 0 : index
    %9 = vector.load %arg9[%c0_6, %c0_7] : memref<16x16xbf16, #tpu.memory_space<vmem>>, vector<16x16xbf16>
    %cst_8 = arith.constant dense<0.000000e+00> : vector<8x16xf32>
    %10 = tpu.matmul %3, %9, %cst_8 {dimension_numbers = #tpu.dot_dimension_numbers<[1], [0], [0], [1], [0, 0, 1, 1], [], []>} : vector<8x16xbf16>, vector<16x16xbf16>, vector<8x16xf32> -> vector<8x16xf32>
    %c0_9 = arith.constant 0 : index
    %c0_10 = arith.constant 0 : index
    %11 = vector.load %arg10[%c0_9, %c0_10] : memref<1x16xf32, #tpu.memory_space<vmem>>, vector<1x16xf32>
    %12 = vector.broadcast %11 : vector<1x16xf32> to vector<8x16xf32>
    %13 = arith.addf %10, %12 : vector<8x16xf32>
    %c0_11 = arith.constant 0 : index
    %c0_12 = arith.constant 0 : index
    %14 = vector.load %arg14[%c0_11, %c0_12] : memref<8x16xbf16, #tpu.memory_space<vmem>>, vector<8x16xbf16>
    %15 = arith.truncf %8 : vector<8x16xf32> to vector<8x16xbf16>
    %cst_13 = arith.constant dense<0.000000e+00> : vector<8x8xf32>
    %16 = tpu.matmul %14, %15, %cst_13 {dimension_numbers = #tpu.dot_dimension_numbers<[1], [1], [0], [0], [0, 0, 1, 0], [], []>} : vector<8x16xbf16>, vector<8x16xbf16>, vector<8x8xf32> -> vector<8x8xf32>
    %c8_i32 = arith.constant 8 : i32
    %17 = arith.muli %arg1, %c8_i32 : i32
    %18 = tpu.iota {dimensions = array<i32: 1>} : vector<8x8xi32>
    %19 = vector.broadcast %17 : i32 to vector<8x8xi32>
    %20 = arith.addi %19, %18 : vector<8x8xi32>
    %c20_i32 = arith.constant 20 : i32
    %21 = vector.broadcast %c20_i32 : i32 to vector<8x8xi32>
    %22 = arith.cmpi slt, %20, %21 : vector<8x8xi32>
    %cst_14 = arith.constant 0xFF800000 : f32
    %23 = vector.broadcast %cst_14 : f32 to vector<8x8xf32>
    %24 = arith.select %22, %16, %23 : vector<8x8xi1>, vector<8x8xf32>
    %c0_15 = arith.constant 0 : index
    %c0_16 = arith.constant 0 : index
    %25 = vector.load %arg15[%c0_15, %c0_16] : memref<8x1xf32, #tpu.memory_space<vmem>>, vector<8x1xf32>
    %cst_17 = arith.constant dense<0xFF800000> : vector<8xf32>
    %26 = vector.multi_reduction <maximumf>, %24, %cst_17 [1] : vector<8x8xf32> to vector<8xf32>
    %27 = vector.shape_cast %26 : vector<8xf32> to vector<8x1xf32>
    %28 = arith.maximumf %25, %27 : vector<8x1xf32>
    %29 = arith.subf %25, %28 : vector<8x1xf32>
    %30 = math.exp %29 : vector<8x1xf32>
    %31 = vector.broadcast %28 : vector<8x1xf32> to vector<8x8xf32>
    %32 = arith.subf %24, %31 : vector<8x8xf32>
    %33 = math.exp %32 : vector<8x8xf32>
    %c0_18 = arith.constant 0 : index
    %c0_19 = arith.constant 0 : index
    %34 = vector.load %arg16[%c0_18, %c0_19] : memref<8x1xf32, #tpu.memory_space<vmem>>, vector<8x1xf32>
    %35 = arith.mulf %30, %34 : vector<8x1xf32>
    %cst_20 = arith.constant dense<0.000000e+00> : vector<8xf32>
    %36 = vector.multi_reduction <add>, %33, %cst_20 [1] : vector<8x8xf32> to vector<8xf32>
    %37 = vector.shape_cast %36 : vector<8xf32> to vector<8x1xf32>
    %38 = arith.addf %35, %37 : vector<8x1xf32>
    %c0_21 = arith.constant 0 : index
    %c0_22 = arith.constant 0 : index
    %39 = vector.load %arg16[%c0_21, %c0_22] : memref<8x1xf32, #tpu.memory_space<vmem>>, vector<8x1xf32>
    tpu.vector_store %arg16[%c0_21, %c0_22], %38 {strides = array<i32>} : memref<8x1xf32, #tpu.memory_space<vmem>>, vector<8x1xf32>,
    %c0_23 = arith.constant 0 : index
    %c0_24 = arith.constant 0 : index
    %40 = vector.load %arg17[%c0_23, %c0_24] : memref<8x16xf32, #tpu.memory_space<vmem>>, vector<8x16xf32>
    %41 = vector.broadcast %30 : vector<8x1xf32> to vector<8x16xf32>
    %42 = arith.mulf %41, %40 : vector<8x16xf32>
    %43 = arith.truncf %33 : vector<8x8xf32> to vector<8x8xbf16>
    %44 = arith.truncf %13 : vector<8x16xf32> to vector<8x16xbf16>
    %cst_25 = arith.constant dense<0.000000e+00> : vector<8x16xf32>
    %45 = tpu.matmul %43, %44, %cst_25 {dimension_numbers = #tpu.dot_dimension_numbers<[1], [0], [0], [1], [0, 0, 1, 1], [], []>} : vector<8x8xbf16>, vector<8x16xbf16>, vector<8x16xf32> -> vector<8x16xf32>
    %46 = arith.addf %42, %45 : vector<8x16xf32>
    %c0_26 = arith.constant 0 : index
    %c0_27 = arith.constant 0 : index
    %47 = vector.load %arg17[%c0_26, %c0_27] : memref<8x16xf32, #tpu.memory_space<vmem>>, vector<8x16xf32>
    tpu.vector_store %arg17[%c0_26, %c0_27], %46 {strides = array<i32>} : memref<8x16xf32, #tpu.memory_space<vmem>>, vector<8x16xf32>,
    %c0_28 = arith.constant 0 : index
    %c0_29 = arith.constant 0 : index
    %48 = vector.load %arg15[%c0_28, %c0_29] : memref<8x1xf32, #tpu.memory_space<vmem>>, vector<8x1xf32>
    tpu.vector_store %arg15[%c0_28, %c0_29], %28 {strides = array<i32>} : memref<8x1xf32, #tpu.memory_space<vmem>>, vector<8x1xf32>,
    %c2_i32 = arith.constant 2 : i32
    %49 = arith.cmpi eq, %arg1, %c2_i32 : i32
    %50 = arith.extui %49 : i1 to i32
    %c0_i32_30 = arith.constant 0 : i32
    %51 = arith.cmpi ne, %50, %c0_i32_30 : i32
    scf.if %51 {
      %c0_31 = arith.constant 0 : index
      %c0_32 = arith.constant 0 : index
      %52 = vector.load %arg16[%c0_31, %c0_32] : memref<8x1xf32, #tpu.memory_space<vmem>>, vector<8x1xf32>
      %53 = tpu.reciprocal %52 {approx = true} : vector<8x1xf32> -> vector<8x1xf32>
      %c0_33 = arith.constant 0 : index
      %c0_34 = arith.constant 0 : index
      %54 = vector.load %arg17[%c0_33, %c0_34] : memref<8x16xf32, #tpu.memory_space<vmem>>, vector<8x16xf32>
      %55 = vector.broadcast %53 : vector<8x1xf32> to vector<8x16xf32>
      %56 = arith.mulf %54, %55 : vector<8x16xf32>
      %c0_35 = arith.constant 0 : index
      %c0_36 = arith.constant 0 : index
      %57 = vector.load %arg3[%c0_35, %c0_36] : memref<8x16xf32, #tpu.memory_space<vmem>>, vector<8x16xf32>
      %58 = arith.addf %56, %57 : vector<8x16xf32>
      %59 = arith.truncf %58 : vector<8x16xf32> to vector<8x16xbf16>
      %c0_37 = arith.constant 0 : index
      %c0_38 = arith.constant 0 : index
      %60 = vector.load %arg11[%c0_37, %c0_38] : memref<16x128xbf16, #tpu.memory_space<vmem>>, vector<16x128xbf16>
      %cst_39 = arith.constant dense<0.000000e+00> : vector<8x128xf32>
      %61 = tpu.matmul %59, %60, %cst_39 {dimension_numbers = #tpu.dot_dimension_numbers<[1], [0], [0], [1], [0, 0, 1, 1], [], []>} : vector<8x16xbf16>, vector<16x128xbf16>, vector<8x128xf32> -> vector<8x128xf32>
      %c0_40 = arith.constant 0 : index
      %c0_41 = arith.constant 0 : index
      %62 = vector.load %arg12[%c0_40, %c0_41] : memref<1x128xf32, #tpu.memory_space<vmem>>, vector<1x128xf32>
      %63 = vector.broadcast %62 : vector<1x128xf32> to vector<8x128xf32>
      %64 = arith.addf %61, %63 : vector<8x128xf32>
      %c0_42 = arith.constant 0 : index
      %c0_43 = arith.constant 0 : index
      %65 = vector.load %arg13[%c0_42, %c0_43] : memref<8x128xf32, #tpu.memory_space<vmem>>, vector<8x128xf32>
      tpu.vector_store %arg13[%c0_42, %c0_43], %64 {strides = array<i32>} : memref<8x128xf32, #tpu.memory_space<vmem>>, vector<8x128xf32>,
    } else {
    }
    return
  }
  func.func @transform_0(%arg0: i32, %arg1: i32) -> (i32, i32) {
    %c0_i32 = arith.constant 0 : i32
    %c0_i32_0 = arith.constant 0 : i32
    return %arg0, %c0_i32 : i32, i32
  }
  func.func @transform_1(%arg0: i32, %arg1: i32) -> (i32, i32) {
    %c0_i32 = arith.constant 0 : i32
    %c0_i32_0 = arith.constant 0 : i32
    return %arg0, %c0_i32 : i32, i32
  }
  func.func @transform_2(%arg0: i32, %arg1: i32) -> (i32, i32) {
    %c0_i32 = arith.constant 0 : i32
    %c0_i32_0 = arith.constant 0 : i32
    return %arg1, %c0_i32 : i32, i32
  }
  func.func @transform_3(%arg0: i32, %arg1: i32) -> (i32, i32) {
    %c0_i32 = arith.constant 0 : i32
    %c0_i32_0 = arith.constant 0 : i32
    %c0_i32_1 = arith.constant 0 : i32
    return %c0_i32, %c0_i32_0 : i32, i32
  }
  func.func @transform_4(%arg0: i32, %arg1: i32) -> (i32, i32) {
    %c0_i32 = arith.constant 0 : i32
    %c0_i32_0 = arith.constant 0 : i32
    %c0_i32_1 = arith.constant 0 : i32
    return %c0_i32, %c0_i32_0 : i32, i32
  }
  func.func @transform_5(%arg0: i32, %arg1: i32) -> (i32, i32) {
    %c0_i32 = arith.constant 0 : i32
    %c0_i32_0 = arith.constant 0 : i32
    %c0_i32_1 = arith.constant 0 : i32
    return %c0_i32, %c0_i32_0 : i32, i32
  }
  func.func @transform_6(%arg0: i32, %arg1: i32) -> (i32, i32) {
    %c0_i32 = arith.constant 0 : i32
    %c0_i32_0 = arith.constant 0 : i32
    %c0_i32_1 = arith.constant 0 : i32
    return %c0_i32, %c0_i32_0 : i32, i32
  }
  func.func @transform_7(%arg0: i32, %arg1: i32) -> (i32, i32) {
    %c0_i32 = arith.constant 0 : i32
    %c0_i32_0 = arith.constant 0 : i32
    %c0_i32_1 = arith.constant 0 : i32
    return %c0_i32, %c0_i32_0 : i32, i32
  }
  func.func @transform_8(%arg0: i32, %arg1: i32) -> (i32, i32) {
    %c0_i32 = arith.constant 0 : i32
    %c0_i32_0 = arith.constant 0 : i32
    %c0_i32_1 = arith.constant 0 : i32
    return %c0_i32, %c0_i32_0 : i32, i32
  }
  func.func @transform_9(%arg0: i32, %arg1: i32) -> (i32, i32) {
    %c0_i32 = arith.constant 0 : i32
    %c0_i32_0 = arith.constant 0 : i32
    %c0_i32_1 = arith.constant 0 : i32
    return %c0_i32, %c0_i32_0 : i32, i32
  }
  func.func @transform_10(%arg0: i32, %arg1: i32) -> (i32, i32) {
    %c0_i32 = arith.constant 0 : i32
    %c0_i32_0 = arith.constant 0 : i32
    %c0_i32_1 = arith.constant 0 : i32
    return %c0_i32, %c0_i32_0 : i32, i32
  }
  func.func @transform_11(%arg0: i32, %arg1: i32) -> (i32, i32) {
    %c0_i32 = arith.constant 0 : i32
    %c0_i32_0 = arith.constant 0 : i32
    return %arg0, %c0_i32 : i32, i32
  }
}

</mosaic_0001>

<llo_original>
// kernel: tpu_custom_call.1
$region0: #{tpu_custom_call.1}
  #allocation0 [shape = 'u32[]', space=smem, size = 0x4, offset = 0x4, fixed_abs, tag = 'smem constant byte address 0x4 - core index']
  #allocation1 [shape = 'u32[144,128]{1,0:T(1,128)}', space=vmem, size = 0x12000, scoped, tag = 'internal scratch']
  #allocation2 [shape = 'bf16[8,16]{1,0:T(8,128)(2,1)}', space=vmem, size = 0x800, scoped, tag = 'scratch operand']
  #allocation3 [shape = 'f32[8,1]{1,0:T(8,128)}', space=vmem, size = 0x1000, scoped, tag = 'scratch operand']
  #allocation4 [shape = 'f32[8,1]{1,0:T(8,128)}', space=vmem, size = 0x1000, scoped, tag = 'scratch operand']
  #allocation5 [shape = 'f32[8,16]{1,0:T(8,128)}', space=vmem, size = 0x1000, scoped, tag = 'scratch operand']
  %s0 = inlined_call_operand.vmem [shape: f32[24,1], index: 0, kind: input, shape index: {}]
  %s1 = inlined_call_operand.vmem [shape: f32[24,16], index: 1, kind: input, shape index: {}]
  %s2 = inlined_call_operand.vmem [shape: bf16[24,16], index: 2, kind: input, shape index: {}]
  %s3 = inlined_call_operand.vmem [shape: f32[8,16], index: 3, kind: input, shape index: {}]
  %s4 = inlined_call_operand.vmem [shape: f32[1,16], index: 4, kind: input, shape index: {}]
  %s5 = inlined_call_operand.vmem [shape: bf16[16,16], index: 5, kind: input, shape index: {}]
  %s6 = inlined_call_operand.vmem [shape: f32[1,16], index: 6, kind: input, shape index: {}]
  %s7 = inlined_call_operand.vmem [shape: bf16[16,16], index: 7, kind: input, shape index: {}]
  %s8 = inlined_call_operand.vmem [shape: f32[1,16], index: 8, kind: input, shape index: {}]
  %s9 = inlined_call_operand.vmem [shape: bf16[16,128], index: 9, kind: input, shape index: {}]
  %s10 = inlined_call_operand.vmem [shape: f32[1,128], index: 10, kind: input, shape index: {}]
  %s11 = inlined_call_operand.hbm [shape: f32[24,128], index: 11, kind: output, shape index: {}]
  %s12 = sld [smem:[#allocation0]]
  $region85: #{tpu_custom_call.1} parent=0
    _
  %s14 = ssub.s32 1, %s12
  %s15 = scalar_select 0, %s14, %s12
  $region1: #{tpu_custom_call.1} parent=0
    #allocation6 [shape = 'u8[8192]{0}', space=vmem, size = 0x2000, scoped, tag = 'output window, operand 0']
    #allocation7 [shape = 's32[2]{0}', space=sflag, size = 0x8, scoped, tag = 'scoped memory for tpu_custom_call.1']
    %16 = vsyncpa [#allocation7], 0
    %s17 = scalar_lea.sflag [#allocation7], 1
    %18 = vsyncpa %s17, 0
    loop: start=0, step=1, limit=11
    $region2: #{tpu_custom_call.1} parent=1 // loop_pre_header
      _
    $region3: #{tpu_custom_call.1} parent=1 // loop_header
      %s20 = sphi 0, %s24
      %p21 = scmp.ge.s32.totalorder %s20, 11
      %s27 = sphi 0, %s39
      %s28 = sphi 0, %s35
      %s29 = sphi 0, %s27
      %s30 = sphi 0, %s28
      %s31 = sphi 0, %s29
      %s32 = sphi 0, %s30
      %s42 = sphi 0, %s44
      %s45 = sphi 0, %s42
      %s46 = sphi 0, %s45
      %s62 = sphi 0, %s46
      %s68 = sphi 0, %s70
      %s71 = sphi 0, %s68
      %s72 = sphi 0, %s71
      %s88 = sphi 0, %s72
      %s94 = sphi 0, %s96
      %s97 = sphi 0, %s94
      %s98 = sphi 0, %s97
      %s114 = sphi 0, %s98
      %s118 = sphi 0, %s118
      %s120 = sphi 0, %s118
      %s121 = sphi 0, %s120
      %s135 = sphi 0, %s121
      %s139 = sphi 0, %s139
      %s141 = sphi 0, %s139
      %s142 = sphi 0, %s141
      %s156 = sphi 0, %s142
      %s160 = sphi 0, %s160
      %s162 = sphi 0, %s160
      %s163 = sphi 0, %s162
      %s177 = sphi 0, %s163
      %s181 = sphi 0, %s181
      %s183 = sphi 0, %s181
      %s184 = sphi 0, %s183
      %s198 = sphi 0, %s184
      %s202 = sphi 0, %s202
      %s204 = sphi 0, %s202
      %s205 = sphi 0, %s204
      %s219 = sphi 0, %s205
      %s223 = sphi 0, %s223
      %s225 = sphi 0, %s223
      %s226 = sphi 0, %s225
      %s240 = sphi 0, %s226
      %s244 = sphi 0, %s244
      %s246 = sphi 0, %s244
      %s247 = sphi 0, %s246
      %s261 = sphi 0, %s247
      %s265 = sphi 0, %s265
      %s267 = sphi 0, %s265
      %s268 = sphi 0, %s267
      %s282 = sphi 0, %s268
      %s288 = sphi 0, %s290
      %s291 = sphi 0, %s288
      %s292 = sphi 0, %s291
      %s308 = sphi 0, %s292
    $region4: #{tpu_custom_call.1} parent=1 // loop_header_branch
      %23 = sbr.rel (%p21) target = $region8
    $region5: #{tpu_custom_call.1} parent=1 // loop_body
      %s25 = ssub.s32 %s20, 1
      %s26 = ssub.s32 %s20, 2
      %s33 = sadd.s32 1, %s28
      %p34 = scmp.ge.s32.totalorder %s33, 3
      %s35 = scalar_select %p34, 0, %s33
      %s36 = sadd.s32 1, %s27
      %s37 = scalar_select %p34, %s36, %s27
      %p38 = scmp.ge.s32.totalorder %s37, 3
      %s39 = scalar_select %p38, 0, %s37
      %s40 = ssub.s32 %s27, %s39
      %p41 = scmp.eq.s32.totalorder %s40, 0
      %s43 = sadd.s32 %s42, 1
      %s44 = scalar_select %p41, %s42, %s43
      %p47 = pneg %p41
      %p48 = scmp.eq.s32.totalorder %s20, 8
      %p49 = por %p47, %p48
      %p50 = scmp.ne.s32.totalorder %s42, %s45
      %p51 = scmp.eq.s32.totalorder %s20, 0
      %p52 = por %p50, %p51
      %p53 = scmp.ne.s32.totalorder %s42, %s45
      %p54 = scmp.eq.s32.totalorder %s25, 8
      %p55 = por %p53, %p54
      %p56 = scmp.ne.s32.totalorder %s45, %s46
      %p57 = scmp.eq.s32.totalorder %s25, 0
      %p58 = por %p56, %p57
      %p59 = scmp.ne.s32.totalorder %s45, %s46
      %p60 = scmp.eq.s32.totalorder %s26, 8
      %p61 = por %p59, %p60
      %p63 = scmp.ne.s32.totalorder %s46, %s62
      %p64 = scmp.eq.s32.totalorder %s26, 0
      %p65 = por %p63, %p64
      %s66 = ssub.s32 %s27, %s39
      %p67 = scmp.eq.s32.totalorder %s66, 0
      %s69 = sadd.s32 %s68, 1
      %s70 = scalar_select %p67, %s68, %s69
      %p73 = pneg %p67
      %p74 = scmp.eq.s32.totalorder %s20, 8
      %p75 = por %p73, %p74
      %p76 = scmp.ne.s32.totalorder %s68, %s71
      %p77 = scmp.eq.s32.totalorder %s20, 0
      %p78 = por %p76, %p77
      %p79 = scmp.ne.s32.totalorder %s68, %s71
      %p80 = scmp.eq.s32.totalorder %s25, 8
      %p81 = por %p79, %p80
      %p82 = scmp.ne.s32.totalorder %s71, %s72
      %p83 = scmp.eq.s32.totalorder %s25, 0
      %p84 = por %p82, %p83
      %p85 = scmp.ne.s32.totalorder %s71, %s72
      %p86 = scmp.eq.s32.totalorder %s26, 8
      %p87 = por %p85, %p86
      %p89 = scmp.ne.s32.totalorder %s72, %s88
      %p90 = scmp.eq.s32.totalorder %s26, 0
      %p91 = por %p89, %p90
      %s92 = ssub.s32 %s28, %s35
      %p93 = scmp.eq.s32.totalorder %s92, 0
      %s95 = sadd.s32 %s94, 1
      %s96 = scalar_select %p93, %s94, %s95
      %p99 = pneg %p93
      %p100 = scmp.eq.s32.totalorder %s20, 8
      %p101 = por %p99, %p100
      %p102 = scmp.ne.s32.totalorder %s94, %s97
      %p103 = scmp.eq.s32.totalorder %s20, 0
      %p104 = por %p102, %p103
      %p105 = scmp.ne.s32.totalorder %s94, %s97
      %p106 = scmp.eq.s32.totalorder %s25, 8
      %p107 = por %p105, %p106
      %p108 = scmp.ne.s32.totalorder %s97, %s98
      %p109 = scmp.eq.s32.totalorder %s25, 0
      %p110 = por %p108, %p109
      %p111 = scmp.ne.s32.totalorder %s97, %s98
      %p112 = scmp.eq.s32.totalorder %s26, 8
      %p113 = por %p111, %p112
      %p115 = scmp.ne.s32.totalorder %s98, %s114
      %p116 = scmp.eq.s32.totalorder %s26, 0
      %p117 = por %p115, %p116
      %s119 = sadd.s32 %s118, 1
      %p122 = scmp.eq.s32.totalorder %s20, 8
      %p123 = scmp.ne.s32.totalorder %s118, %s120
      %p124 = scmp.eq.s32.totalorder %s20, 0
      %p125 = por %p123, %p124
      %p126 = scmp.ne.s32.totalorder %s118, %s120
      %p127 = scmp.eq.s32.totalorder %s25, 8
      %p128 = por %p126, %p127
      %p129 = scmp.ne.s32.totalorder %s120, %s121
      %p130 = scmp.eq.s32.totalorder %s25, 0
      %p131 = por %p129, %p130
      %p132 = scmp.ne.s32.totalorder %s120, %s121
      %p133 = scmp.eq.s32.totalorder %s26, 8
      %p134 = por %p132, %p133
      %p136 = scmp.ne.s32.totalorder %s121, %s135
      %p137 = scmp.eq.s32.totalorder %s26, 0
      %p138 = por %p136, %p137
      %s140 = sadd.s32 %s139, 1
      %p143 = scmp.eq.s32.totalorder %s20, 8
      %p144 = scmp.ne.s32.totalorder %s139, %s141
      %p145 = scmp.eq.s32.totalorder %s20, 0
      %p146 = por %p144, %p145
      %p147 = scmp.ne.s32.totalorder %s139, %s141
      %p148 = scmp.eq.s32.totalorder %s25, 8
      %p149 = por %p147, %p148
      %p150 = scmp.ne.s32.totalorder %s141, %s142
      %p151 = scmp.eq.s32.totalorder %s25, 0
      %p152 = por %p150, %p151
      %p153 = scmp.ne.s32.totalorder %s141, %s142
      %p154 = scmp.eq.s32.totalorder %s26, 8
      %p155 = por %p153, %p154
      %p157 = scmp.ne.s32.totalorder %s142, %s156
      %p158 = scmp.eq.s32.totalorder %s26, 0
      %p159 = por %p157, %p158
      %s161 = sadd.s32 %s160, 1
      %p164 = scmp.eq.s32.totalorder %s20, 8
      %p165 = scmp.ne.s32.totalorder %s160, %s162
      %p166 = scmp.eq.s32.totalorder %s20, 0
      %p167 = por %p165, %p166
      %p168 = scmp.ne.s32.totalorder %s160, %s162
      %p169 = scmp.eq.s32.totalorder %s25, 8
      %p170 = por %p168, %p169
      %p171 = scmp.ne.s32.totalorder %s162, %s163
      %p172 = scmp.eq.s32.totalorder %s25, 0
      %p173 = por %p171, %p172
      %p174 = scmp.ne.s32.totalorder %s162, %s163
      %p175 = scmp.eq.s32.totalorder %s26, 8
      %p176 = por %p174, %p175
      %p178 = scmp.ne.s32.totalorder %s163, %s177
      %p179 = scmp.eq.s32.totalorder %s26, 0
      %p180 = por %p178, %p179
      %s182 = sadd.s32 %s181, 1
      %p185 = scmp.eq.s32.totalorder %s20, 8
      %p186 = scmp.ne.s32.totalorder %s181, %s183
      %p187 = scmp.eq.s32.totalorder %s20, 0
      %p188 = por %p186, %p187
      %p189 = scmp.ne.s32.totalorder %s181, %s183
      %p190 = scmp.eq.s32.totalorder %s25, 8
      %p191 = por %p189, %p190
      %p192 = scmp.ne.s32.totalorder %s183, %s184
      %p193 = scmp.eq.s32.totalorder %s25, 0
      %p194 = por %p192, %p193
      %p195 = scmp.ne.s32.totalorder %s183, %s184
      %p196 = scmp.eq.s32.totalorder %s26, 8
      %p197 = por %p195, %p196
      %p199 = scmp.ne.s32.totalorder %s184, %s198
      %p200 = scmp.eq.s32.totalorder %s26, 0
      %p201 = por %p199, %p200
      %s203 = sadd.s32 %s202, 1
      %p206 = scmp.eq.s32.totalorder %s20, 8
      %p207 = scmp.ne.s32.totalorder %s202, %s204
      %p208 = scmp.eq.s32.totalorder %s20, 0
      %p209 = por %p207, %p208
      %p210 = scmp.ne.s32.totalorder %s202, %s204
      %p211 = scmp.eq.s32.totalorder %s25, 8
      %p212 = por %p210, %p211
      %p213 = scmp.ne.s32.totalorder %s204, %s205
      %p214 = scmp.eq.s32.totalorder %s25, 0
      %p215 = por %p213, %p214
      %p216 = scmp.ne.s32.totalorder %s204, %s205
      %p217 = scmp.eq.s32.totalorder %s26, 8
      %p218 = por %p216, %p217
      %p220 = scmp.ne.s32.totalorder %s205, %s219
      %p221 = scmp.eq.s32.totalorder %s26, 0
      %p222 = por %p220, %p221
      %s224 = sadd.s32 %s223, 1
      %p227 = scmp.eq.s32.totalorder %s20, 8
      %p228 = scmp.ne.s32.totalorder %s223, %s225
      %p229 = scmp.eq.s32.totalorder %s20, 0
      %p230 = por %p228, %p229
      %p231 = scmp.ne.s32.totalorder %s223, %s225
      %p232 = scmp.eq.s32.totalorder %s25, 8
      %p233 = por %p231, %p232
      %p234 = scmp.ne.s32.totalorder %s225, %s226
      %p235 = scmp.eq.s32.totalorder %s25, 0
      %p236 = por %p234, %p235
      %p237 = scmp.ne.s32.totalorder %s225, %s226
      %p238 = scmp.eq.s32.totalorder %s26, 8
      %p239 = por %p237, %p238
      %p241 = scmp.ne.s32.totalorder %s226, %s240
      %p242 = scmp.eq.s32.totalorder %s26, 0
      %p243 = por %p241, %p242
      %s245 = sadd.s32 %s244, 1
      %p248 = scmp.eq.s32.totalorder %s20, 8
      %p249 = scmp.ne.s32.totalorder %s244, %s246
      %p250 = scmp.eq.s32.totalorder %s20, 0
      %p251 = por %p249, %p250
      %p252 = scmp.ne.s32.totalorder %s244, %s246
      %p253 = scmp.eq.s32.totalorder %s25, 8
      %p254 = por %p252, %p253
      %p255 = scmp.ne.s32.totalorder %s246, %s247
      %p256 = scmp.eq.s32.totalorder %s25, 0
      %p257 = por %p255, %p256
      %p258 = scmp.ne.s32.totalorder %s246, %s247
      %p259 = scmp.eq.s32.totalorder %s26, 8
      %p260 = por %p258, %p259
      %p262 = scmp.ne.s32.totalorder %s247, %s261
      %p263 = scmp.eq.s32.totalorder %s26, 0
      %p264 = por %p262, %p263
      %s266 = sadd.s32 %s265, 1
      %p269 = scmp.eq.s32.totalorder %s20, 8
      %p270 = scmp.ne.s32.totalorder %s265, %s267
      %p271 = scmp.eq.s32.totalorder %s20, 0
      %p272 = por %p270, %p271
      %p273 = scmp.ne.s32.totalorder %s265, %s267
      %p274 = scmp.eq.s32.totalorder %s25, 8
      %p275 = por %p273, %p274
      %p276 = scmp.ne.s32.totalorder %s267, %s268
      %p277 = scmp.eq.s32.totalorder %s25, 0
      %p278 = por %p276, %p277
      %p279 = scmp.ne.s32.totalorder %s267, %s268
      %p280 = scmp.eq.s32.totalorder %s26, 8
      %p281 = por %p279, %p280
      %p283 = scmp.ne.s32.totalorder %s268, %s282
      %p284 = scmp.eq.s32.totalorder %s26, 0
      %p285 = por %p283, %p284
      %s286 = ssub.s32 %s27, %s39
      %p287 = scmp.eq.s32.totalorder %s286, 0
      %s289 = sadd.s32 %s288, 1
      %s290 = scalar_select %p287, %s288, %s289
      %p293 = pneg %p287
      %p294 = scmp.eq.s32.totalorder %s20, 8
      %p295 = por %p293, %p294
      %p296 = scmp.ne.s32.totalorder %s288, %s291
      %p297 = scmp.eq.s32.totalorder %s20, 0
      %p298 = por %p296, %p297
      %p299 = scmp.ne.s32.totalorder %s288, %s291
      %p300 = scmp.eq.s32.totalorder %s25, 8
      %p301 = por %p299, %p300
      %p302 = scmp.ne.s32.totalorder %s291, %s292
      %p303 = scmp.eq.s32.totalorder %s25, 0
      %p304 = por %p302, %p303
      %p305 = scmp.ne.s32.totalorder %s291, %s292
      %p306 = scmp.eq.s32.totalorder %s26, 8
      %p307 = por %p305, %p306
      %p309 = scmp.ne.s32.totalorder %s292, %s308
      %p310 = scmp.eq.s32.totalorder %s26, 0
      %p311 = por %p309, %p310
      %p312 = scmp.le.s32.totalorder 1, %s20
      %p313 = scmp.lt.s32.totalorder %s20, 10
      %p314 = pnand %p312, %p313
      %p315 = pneg %p314
      // Predicated region
      $region9: #{tpu_custom_call.1} parent=5 // pred_check
        _
      $region10: #{tpu_custom_call.1} parent=5 // pred_check_branch
        %317 = sbr.rel (%p314) target = $region12
      $region11: #{tpu_custom_call.1} parent=5 // pred_region
        %s318 = ssub.s32 %s20, 1
        // Predicated region
        $region13: #{tpu_custom_call.1} parent=11 // pred_check
          %p319 = pneg %p131
        $region14: #{tpu_custom_call.1} parent=11 // pred_check_branch
          %321 = sbr.rel (%p319) target = $region16
        $region15: #{tpu_custom_call.1} parent=11 // pred_region
          _
        $region16: #{tpu_custom_call.1} parent=11 // pred_fallthru
          _
        // Predicated region
        $region17: #{tpu_custom_call.1} parent=11 // pred_check
          %p322 = pneg %p152
        $region18: #{tpu_custom_call.1} parent=11 // pred_check_branch
          %324 = sbr.rel (%p322) target = $region20
        $region19: #{tpu_custom_call.1} parent=11 // pred_region
          _
        $region20: #{tpu_custom_call.1} parent=11 // pred_fallthru
          _
        // Predicated region
        $region21: #{tpu_custom_call.1} parent=11 // pred_check
          %p325 = pneg %p173
        $region22: #{tpu_custom_call.1} parent=11 // pred_check_branch
          %327 = sbr.rel (%p325) target = $region24
        $region23: #{tpu_custom_call.1} parent=11 // pred_region
          _
        $region24: #{tpu_custom_call.1} parent=11 // pred_fallthru
          _
        // Predicated region
        $region25: #{tpu_custom_call.1} parent=11 // pred_check
          %p328 = pneg %p194
        $region26: #{tpu_custom_call.1} parent=11 // pred_check_branch
          %330 = sbr.rel (%p328) target = $region28
        $region27: #{tpu_custom_call.1} parent=11 // pred_region
          _
        $region28: #{tpu_custom_call.1} parent=11 // pred_fallthru
          _
        // Predicated region
        $region29: #{tpu_custom_call.1} parent=11 // pred_check
          %p331 = pneg %p215
        $region30: #{tpu_custom_call.1} parent=11 // pred_check_branch
          %333 = sbr.rel (%p331) target = $region32
        $region31: #{tpu_custom_call.1} parent=11 // pred_region
          _
        $region32: #{tpu_custom_call.1} parent=11 // pred_fallthru
          _
        // Predicated region
        $region33: #{tpu_custom_call.1} parent=11 // pred_check
          %p334 = pneg %p236
        $region34: #{tpu_custom_call.1} parent=11 // pred_check_branch
          %336 = sbr.rel (%p334) target = $region36
        $region35: #{tpu_custom_call.1} parent=11 // pred_region
          _
        $region36: #{tpu_custom_call.1} parent=11 // pred_fallthru
          _
        // Predicated region
        $region37: #{tpu_custom_call.1} parent=11 // pred_check
          %p337 = pneg %p257
        $region38: #{tpu_custom_call.1} parent=11 // pred_check_branch
          %339 = sbr.rel (%p337) target = $region40
        $region39: #{tpu_custom_call.1} parent=11 // pred_region
          _
        $region40: #{tpu_custom_call.1} parent=11 // pred_fallthru
          _
        // Predicated region
        $region41: #{tpu_custom_call.1} parent=11 // pred_check
          %p340 = pneg %p278
        $region42: #{tpu_custom_call.1} parent=11 // pred_check_branch
          %342 = sbr.rel (%p340) target = $region44
        $region43: #{tpu_custom_call.1} parent=11 // pred_region
          _
        $region44: #{tpu_custom_call.1} parent=11 // pred_fallthru
          _
      $region12: #{tpu_custom_call.1} parent=5 // pred_fallthru
        _
      %p343 = scmp.lt.s32.totalorder %s20, 9
      // Predicated region
      $region45: #{tpu_custom_call.1} parent=5 // pred_check
        %p344 = pneg %p343
      $region46: #{tpu_custom_call.1} parent=5 // pred_check_branch
        %346 = sbr.rel (%p344) target = $region48
      $region47: #{tpu_custom_call.1} parent=5 // pred_region
        // Predicated region
        $region49: #{tpu_custom_call.1} parent=47 // pred_check
          %p347 = pneg %p52
        $region50: #{tpu_custom_call.1} parent=47 // pred_check_branch
          %349 = sbr.rel (%p347) target = $region52
        $region51: #{tpu_custom_call.1} parent=47 // pred_region
          %p350 = scmp.lt.s32.totalorder %s27, 2
          %s351 = scalar_select %p350, %s27, 2
          %s352 = smul.addr %s351, 8
          %s353 = scalar_lea.vmem %s0, %s352
        $region52: #{tpu_custom_call.1} parent=47 // pred_fallthru
          _
        // Predicated region
        $region53: #{tpu_custom_call.1} parent=47 // pred_check
          %p354 = pneg %p78
        $region54: #{tpu_custom_call.1} parent=47 // pred_check_branch
          %356 = sbr.rel (%p354) target = $region56
        $region55: #{tpu_custom_call.1} parent=47 // pred_region
          %p357 = scmp.lt.s32.totalorder %s27, 2
          %s358 = scalar_select %p357, %s27, 2
          %s359 = smul.addr %s358, 8
          %s360 = scalar_lea.vmem %s1, %s359
        $region56: #{tpu_custom_call.1} parent=47 // pred_fallthru
          _
        // Predicated region
        $region57: #{tpu_custom_call.1} parent=47 // pred_check
          %p361 = pneg %p104
        $region58: #{tpu_custom_call.1} parent=47 // pred_check_branch
          %363 = sbr.rel (%p361) target = $region60
        $region59: #{tpu_custom_call.1} parent=47 // pred_region
          %p364 = scmp.lt.s32.totalorder %s28, 2
          %s365 = scalar_select %p364, %s28, 2
          %s366 = smul.addr %s365, 4
          %s367 = scalar_lea.vmem %s2, %s366
        $region60: #{tpu_custom_call.1} parent=47 // pred_fallthru
          _
      $region48: #{tpu_custom_call.1} parent=5 // pred_fallthru
        _
      %p368 = scmp.le.s32.totalorder 1, %s20
      %p369 = scmp.lt.s32.totalorder %s20, 10
      %p370 = pnand %p368, %p369
      %p371 = pneg %p370
      // Predicated region
      $region61: #{tpu_custom_call.1} parent=5 // pred_check
        _
      $region62: #{tpu_custom_call.1} parent=5 // pred_check_branch
        %373 = sbr.rel (%p370) target = $region64
      $region63: #{tpu_custom_call.1} parent=5 // pred_region
        %s374 = ssub.s32 %s20, 1
        %p375 = scmp.lt.s32.totalorder %s29, 2
        %s376 = scalar_select %p375, %s29, 2
        %s377 = smul.addr %s376, 8
        %s378 = scalar_lea.vmem %s0, %s377
        %p379 = pneg %p58
        %p380 = pneg %p55
        %p381 = scmp.lt.s32.totalorder %s29, 2
        %s382 = scalar_select %p381, %s29, 2
        %s383 = smul.addr %s382, 8
        %s384 = scalar_lea.vmem %s1, %s383
        %p385 = pneg %p84
        %p386 = pneg %p81
        %p387 = scmp.lt.s32.totalorder %s30, 2
        %s388 = scalar_select %p387, %s30, 2
        %s389 = smul.addr %s388, 4
        %s390 = scalar_lea.vmem %s2, %s389
        %p391 = pneg %p110
        %p392 = pneg %p107
        %p393 = pneg %p131
        %p394 = pneg %p128
        %p395 = pneg %p152
        %p396 = pneg %p149
        %p397 = pneg %p173
        %p398 = pneg %p170
        %p399 = pneg %p194
        %p400 = pneg %p191
        %p401 = pneg %p215
        %p402 = pneg %p212
        %p403 = pneg %p236
        %p404 = pneg %p233
        %p405 = pneg %p257
        %p406 = pneg %p254
        %p407 = pneg %p278
        %p408 = pneg %p275
        %p409 = pneg %p304
        %p410 = pneg %p301
        %s411 = sand.u32 %s291, 1
        %s412 = scalar_lea.sflag [#allocation7], %s411
        %s413 = sand.u32 %s291, 1
        %s414 = smul.addr %s413, 8
        %s415 = scalar_lea.vmem [#allocation6], %s414
        %p416 = scmp.lt.s32.totalorder %s29, 2
        %s417 = scalar_select %p416, %s29, 2
        %s418 = smul.addr %s417, 8
        %s419 = scalar_lea.vmem %s0, %s418
        %p420 = scmp.lt.s32.totalorder %s29, 2
        %s421 = scalar_select %p420, %s29, 2
        %s422 = smul.addr %s421, 8
        %s423 = scalar_lea.vmem %s1, %s422
        %p424 = scmp.lt.s32.totalorder %s30, 2
        %s425 = scalar_select %p424, %s30, 2
        %s426 = smul.addr %s425, 4
        %s427 = scalar_lea.vmem %s2, %s426
        %p429 = scmp.eq.s32.totalorder %s30, 0
        // Predicated region
        $region65: #{tpu_custom_call.1} parent=63 // pred_check
          %p430 = pneg %p429
        $region66: #{tpu_custom_call.1} parent=63 // pred_check_branch
          %432 = sbr.rel (%p430) target = $region68
        $region67: #{tpu_custom_call.1} parent=63 // pred_region
          %v433 = vld [vmem:[%s419] sm:$0xff]
          %v434 = vmul.f32 %v433, %v433
          %v435 = vmul.f32 %v434, %v433
          %v436 = vmul.f32 %v435, %v433
          %v437 = vmul.f32 %v436, %v433
          %v438 = vsub.f32 %v433, 0.33333334
          %v439 = vmax.f32 %v438, 0.0
          %v440 = vmul.f32 %v439, %v439
          %v441 = vmul.f32 %v440, %v440
          %v442 = vmul.f32 %v439, %v441
          %v443 = vsub.f32 %v433, 0.6666667
          %v444 = vmax.f32 %v443, 0.0
          %v445 = vmul.f32 %v444, %v444
          %v446 = vmul.f32 %v445, %v445
          %v447 = vmul.f32 %v444, %v446
          %v448 = vld [vmem:[%s3] sm:$0xff]
          %v449 = vld [vmem:[%s4] sm:$0x1]
          %v451 = vlaneseq
          %v452 = vshrl.u32 %v451, 7
          %v453 = vsub.s32 0, %v452
          %v454 = vrot.slane %v449, %v453
          %v456 = vlaneseq
          %v457 = vshrl.u32 %v456, 7
          %v458 = vsub.s32 0, %v457
          %v459 = vrot.slane %v448, %v458
          %v460 = vadd.f32 %v454, %v459
          %462 = vset.pattern.permute.xlu0 0
          %463 = vperm.xlu0 %462, %v433
          %v464 = vpop.permute.xlu0 %463
          %v466 = vlaneseq
          %v467 = vshrl.u32 %v466, 7
          %v468 = vsub.s32 1, %v467
          %v469 = vrot.slane %v448, %v468
          %v470 = vmul.f32 %v464, %v469
          %v471 = vadd.f32 %v460, %v470
          %473 = vset.pattern.permute.xlu0 0
          %474 = vperm.xlu0 %473, %v434
          %v475 = vpop.permute.xlu0 %474
          %v477 = vlaneseq
          %v478 = vshrl.u32 %v477, 7
          %v479 = vsub.s32 2, %v478
          %v480 = vrot.slane %v448, %v479
          %v481 = vmul.f32 %v475, %v480
          %v482 = vadd.f32 %v471, %v481
          %484 = vset.pattern.permute.xlu0 0
          %485 = vperm.xlu0 %484, %v435
          %v486 = vpop.permute.xlu0 %485
          %v488 = vlaneseq
          %v489 = vshrl.u32 %v488, 7
          %v490 = vsub.s32 3, %v489
          %v491 = vrot.slane %v448, %v490
          %v492 = vmul.f32 %v486, %v491
          %v493 = vadd.f32 %v482, %v492
          %495 = vset.pattern.permute.xlu0 0
          %496 = vperm.xlu0 %495, %v436
          %v497 = vpop.permute.xlu0 %496
          %v499 = vlaneseq
          %v500 = vshrl.u32 %v499, 7
          %v501 = vsub.s32 4, %v500
          %v502 = vrot.slane %v448, %v501
          %v503 = vmul.f32 %v497, %v502
          %v504 = vadd.f32 %v493, %v503
          %506 = vset.pattern.permute.xlu0 0
          %507 = vperm.xlu0 %506, %v437
          %v508 = vpop.permute.xlu0 %507
          %v510 = vlaneseq
          %v511 = vshrl.u32 %v510, 7
          %v512 = vsub.s32 5, %v511
          %v513 = vrot.slane %v448, %v512
          %v514 = vmul.f32 %v508, %v513
          %v515 = vadd.f32 %v504, %v514
          %517 = vset.pattern.permute.xlu0 0
          %518 = vperm.xlu0 %517, %v442
          %v519 = vpop.permute.xlu0 %518
          %v521 = vlaneseq
          %v522 = vshrl.u32 %v521, 7
          %v523 = vsub.s32 6, %v522
          %v524 = vrot.slane %v448, %v523
          %v525 = vmul.f32 %v519, %v524
          %v526 = vadd.f32 %v515, %v525
          %528 = vset.pattern.permute.xlu0 0
          %529 = vperm.xlu0 %528, %v447
          %v530 = vpop.permute.xlu0 %529
          %v532 = vlaneseq
          %v533 = vshrl.u32 %v532, 7
          %v534 = vsub.s32 7, %v533
          %v535 = vrot.slane %v448, %v534
          %v536 = vmul.f32 %v530, %v535
          %v537 = vadd.f32 %v526, %v536
          %v538 = vpack.c.bf16 %v537, %v537
          %vm539 = vcmask 125952
          %540 = vst.msk [vmem:[#allocation2] sm:$0xf] %vm539, %v538
          %vm541 = vcmask 7168
          %542 = vst.msk [vmem:[#allocation3] sm:$0xff] %vm541, -inf
          %543 = vst.msk [vmem:[#allocation4] sm:$0xff] %vm541, 0.0
          %vm544 = vcmask 130048
          %545 = vst.msk [vmem:[#allocation5] sm:$0xff] %vm544, 0.0
        $region68: #{tpu_custom_call.1} parent=63 // pred_fallthru
          _
        %v546 = vld [vmem:[%s427] sm:$0xf]
        %v547 = vld [vmem:[%s5] sm:$0xf]
        %v548 = vld [vmem:[%s5 + $0x4] sm:$0xf]
        %v549 = vld [vmem:[%s6] sm:$0x1]
        %v551 = vlaneseq
        %v552 = vshrl.u32 %v551, 7
        %v553 = vsub.s32 0, %v552
        %v554 = vrot.slane %v549, %v553
        %v558 = vunpack.c.l.b16 %v547
        %v559 = vunpack.c.l.b16 %v548
        %v560 = vpack.c.b16 %v559, %v558
        %vm562 = vcmask 130048
        %v564 = vsel %vm562, %v546, 0
        %566 = vmatprep.subr.bf16.mxu0 0
        %567 = vmatpush1.bf16.msra.mxu0 0
        %568 = vmatprep.subr.bf16.mxu0 0
        %569 = vmatpush1.bf16.msra.mxu0 0
        %570 = vmatprep.subr.bf16.mxu0 0
        %571 = vmatpush1.bf16.msra.mxu0 0
        %572 = vmatprep.subr.bf16.mxu0 0
        %573 = vmatpush1.bf16.msra.mxu0 0
        %574 = vmatprep.subr.bf16.mxu0 0
        %575 = vmatpush1.bf16.msra.mxu0 0
        %576 = vmatprep.subr.bf16.mxu0 0
        %577 = vmatpush1.bf16.msra.mxu0 0
        %578 = vmatprep.subr.bf16.mxu0 0
        %579 = vmatpush1.bf16.msra.mxu0 0
        %580 = vmatprep.subr.bf16.mxu0 0
        %581 = vmatpush1.bf16.msra.mxu0 %v560
        %582 = vmatprep.subr.bf16.mxu0 0
        %583 = vmatpush2.bf16.msra.mxu0 0
        %584 = vmatprep.subr.bf16.mxu0 0
        %585 = vmatpush2.bf16.msra.mxu0 0
        %586 = vmatprep.subr.bf16.mxu0 0
        %587 = vmatpush2.bf16.msra.mxu0 0
        %588 = vmatprep.subr.bf16.mxu0 0
        %589 = vmatpush2.bf16.msra.mxu0 0
        %590 = vmatprep.subr.bf16.mxu0 0
        %591 = vmatpush2.bf16.msra.mxu0 0
        %592 = vmatprep.subr.bf16.mxu0 0
        %593 = vmatpush2.bf16.msra.mxu0 0
        %594 = vmatprep.subr.bf16.mxu0 0
        %595 = vmatpush2.bf16.msra.mxu0 0
        %596 = vmatprep.subr.bf16.mxu0 0
        %597 = vmatpush2.bf16.msra.mxu0 0
        %598 = vmatprep.mubr.bf16.mxu0 0
        %599 = vmatmul.mubr.bf16.gmra.mxu0 %v564
        %v600 = vpop.f32.mrf.mxu0
        %v601 = vadd.f32 %v554, %v600
        %v602 = vpop.f32.mrf.mxu0
        %v603 = vpop.f32.mrf.mxu0
        %v604 = vpop.f32.mrf.mxu0
        %605 = vdwg.mxu0
        %v606 = vld [vmem:[%s7] sm:$0xf]
        %v607 = vld [vmem:[%s7 + $0x4] sm:$0xf]
        %v608 = vld [vmem:[%s8] sm:$0x1]
        %v610 = vlaneseq
        %v611 = vshrl.u32 %v610, 7
        %v612 = vsub.s32 0, %v611
        %v613 = vrot.slane %v608, %v612
        %v617 = vunpack.c.l.b16 %v606
        %v618 = vunpack.c.l.b16 %v607
        %v619 = vpack.c.b16 %v618, %v617
        %621 = vmatprep.subr.bf16.mxu0 0
        %622 = vmatpush1.bf16.msra.mxu0 0
        %623 = vmatprep.subr.bf16.mxu0 0
        %624 = vmatpush1.bf16.msra.mxu0 0
        %625 = vmatprep.subr.bf16.mxu0 0
        %626 = vmatpush1.bf16.msra.mxu0 0
        %627 = vmatprep.subr.bf16.mxu0 0
        %628 = vmatpush1.bf16.msra.mxu0 0
        %629 = vmatprep.subr.bf16.mxu0 0
        %630 = vmatpush1.bf16.msra.mxu0 0
        %631 = vmatprep.subr.bf16.mxu0 0
        %632 = vmatpush1.bf16.msra.mxu0 0
        %633 = vmatprep.subr.bf16.mxu0 0
        %634 = vmatpush1.bf16.msra.mxu0 0
        %635 = vmatprep.subr.bf16.mxu0 0
        %636 = vmatpush1.bf16.msra.mxu0 %v619
        %637 = vmatprep.subr.bf16.mxu0 0
        %638 = vmatpush2.bf16.msra.mxu0 0
        %639 = vmatprep.subr.bf16.mxu0 0
        %640 = vmatpush2.bf16.msra.mxu0 0
        %641 = vmatprep.subr.bf16.mxu0 0
        %642 = vmatpush2.bf16.msra.mxu0 0
        %643 = vmatprep.subr.bf16.mxu0 0
        %644 = vmatpush2.bf16.msra.mxu0 0
        %645 = vmatprep.subr.bf16.mxu0 0
        %646 = vmatpush2.bf16.msra.mxu0 0
        %647 = vmatprep.subr.bf16.mxu0 0
        %648 = vmatpush2.bf16.msra.mxu0 0
        %649 = vmatprep.subr.bf16.mxu0 0
        %650 = vmatpush2.bf16.msra.mxu0 0
        %651 = vmatprep.subr.bf16.mxu0 0
        %652 = vmatpush2.bf16.msra.mxu0 0
        %653 = vmatprep.mubr.bf16.mxu0 0
        %654 = vmatmul.mubr.bf16.gmra.mxu0 %v564
        %v655 = vpop.f32.mrf.mxu0
        %v656 = vadd.f32 %v613, %v655
        %v657 = vpop.f32.mrf.mxu0
        %v658 = vpop.f32.mrf.mxu0
        %v659 = vpop.f32.mrf.mxu0
        %660 = vdwg.mxu0
        %v661 = vld [vmem:[#allocation2] sm:$0xf]
        %v662 = vpack.c.bf16 %v601, %v601
        %v664 = vsel %vm562, %v661, 0
        %v667 = vsel %vm562, %v662, 0
        %669 = vmatprep.subr.bf16.mxu0 0
        %670 = vmatpush1.bf16.xpose.msra.mxu0 0
        %671 = vmatprep.subr.bf16.mxu0 0
        %672 = vmatpush1.bf16.xpose.msra.mxu0 0
        %673 = vmatprep.subr.bf16.mxu0 0
        %674 = vmatpush1.bf16.xpose.msra.mxu0 0
        %675 = vmatprep.subr.bf16.mxu0 0
        %676 = vmatpush1.bf16.xpose.msra.mxu0 0
        %677 = vmatprep.subr.bf16.mxu0 0
        %678 = vmatpush1.bf16.xpose.msra.mxu0 0
        %679 = vmatprep.subr.bf16.mxu0 0
        %680 = vmatpush1.bf16.xpose.msra.mxu0 0
        %681 = vmatprep.subr.bf16.mxu0 0
        %682 = vmatpush1.bf16.xpose.msra.mxu0 0
        %683 = vmatprep.subr.bf16.mxu0 0
        %684 = vmatpush1.bf16.xpose.msra.mxu0 %v667
        %685 = vmatprep.subr.bf16.mxu0 0
        %686 = vmatpush2.bf16.xpose.msra.mxu0 0
        %687 = vmatprep.subr.bf16.mxu0 0
        %688 = vmatpush2.bf16.xpose.msra.mxu0 0
        %689 = vmatprep.subr.bf16.mxu0 0
        %690 = vmatpush2.bf16.xpose.msra.mxu0 0
        %691 = vmatprep.subr.bf16.mxu0 0
        %692 = vmatpush2.bf16.xpose.msra.mxu0 0
        %693 = vmatprep.subr.bf16.mxu0 0
        %694 = vmatpush2.bf16.xpose.msra.mxu0 0
        %695 = vmatprep.subr.bf16.mxu0 0
        %696 = vmatpush2.bf16.xpose.msra.mxu0 0
        %697 = vmatprep.subr.bf16.mxu0 0
        %698 = vmatpush2.bf16.xpose.msra.mxu0 0
        %699 = vmatprep.subr.bf16.mxu0 0
        %700 = vmatpush2.bf16.xpose.msra.mxu0 0
        %701 = vmatprep.mubr.bf16.mxu0 0
        %702 = vmatmul.mubr.bf16.gmra.mxu0 %v664
        %v703 = vpop.f32.mrf.mxu0
        %v704 = vadd.f32 0.0, %v703
        %v705 = vpop.f32.mrf.mxu0
        %v706 = vpop.f32.mrf.mxu0
        %v707 = vpop.f32.mrf.mxu0
        %708 = vdwg.mxu0
        %s709 = smul.u32 %s30, 8
        %v710 = vlaneseq
        %v711 = vand.u32 %v710, 127
        %v712 = vstv %s709
        %v713 = vadd.s32 %v712, %v711
        %vm714 = vcmp.lt.s32.totalorder %v713, 20
        %v715 = vsel %vm714, %v704, -inf
        %v716 = vld [vmem:[#allocation3] sm:$0xff]
        %vm717 = vcmask 64512
        %v718 = vsel %vm717, %v715, -inf
        %719 = vmax.xlane.f32.xlu0 %v718
        %v720 = vpop.xlane.xlu0 %719
        %v721 = vmax.f32 %v716, %v720
        %v722 = vsub.f32 %v716, %v721
        %v723 = vmul.f32 %v722, 1.442695
        %v724 = vpow.pop %v723
        %726 = vset.pattern.permute.xlu0 0
        %727 = vperm.xlu0 %726, %v721
        %v728 = vpop.permute.xlu0 %727
        %v730 = vsub.f32 %v715, %v728
        %v731 = vmul.f32 %v730, 1.442695
        %v732 = vpow.pop %v731
        %v733 = vld [vmem:[#allocation4] sm:$0xff]
        %v734 = vmul.f32 %v724, %v733
        %v735 = vsel %vm717, %v732, 0.0
        %736 = vadd.xlane.f32.xlu0 %v735
        %v737 = vpop.xlane.xlu0 %736
        %v738 = vadd.f32 %v734, %v737
        %vm739 = vcmask 7168
        %740 = vst.msk [vmem:[#allocation4] sm:$0xff] %vm739, %v738
        %v741 = vld [vmem:[#allocation5] sm:$0xff]
        %743 = vset.pattern.permute.xlu0 0
        %744 = vperm.xlu0 %743, %v724
        %v745 = vpop.permute.xlu0 %744
        %v747 = vmul.f32 %v745, %v741
        %v748 = vpack.c.bf16 %v732, %v732
        %v749 = vpack.c.bf16 %v656, %v656
        %v751 = vsel %vm717, %v748, 0
        %vm753 = vcmask 1043456
        %v755 = vsel %vm753, %v749, 0
        %757 = vmatprep.subr.bf16.mxu0 0
        %758 = vmatpush1.bf16.msra.mxu0 0
        %759 = vmatprep.subr.bf16.mxu0 0
        %760 = vmatpush1.bf16.msra.mxu0 0
        %761 = vmatprep.subr.bf16.mxu0 0
        %762 = vmatpush1.bf16.msra.mxu0 0
        %763 = vmatprep.subr.bf16.mxu0 0
        %764 = vmatpush1.bf16.msra.mxu0 0
        %765 = vmatprep.subr.bf16.mxu0 0
        %766 = vmatpush1.bf16.msra.mxu0 0
        %767 = vmatprep.subr.bf16.mxu0 0
        %768 = vmatpush1.bf16.msra.mxu0 0
        %769 = vmatprep.subr.bf16.mxu0 0
        %770 = vmatpush1.bf16.msra.mxu0 0
        %771 = vmatprep.subr.bf16.mxu0 0
        %772 = vmatpush1.bf16.msra.mxu0 %v755
        %773 = vmatprep.subr.bf16.mxu0 0
        %774 = vmatpush2.bf16.msra.mxu0 0
        %775 = vmatprep.subr.bf16.mxu0 0
        %776 = vmatpush2.bf16.msra.mxu0 0
        %777 = vmatprep.subr.bf16.mxu0 0
        %778 = vmatpush2.bf16.msra.mxu0 0
        %779 = vmatprep.subr.bf16.mxu0 0
        %780 = vmatpush2.bf16.msra.mxu0 0
        %781 = vmatprep.subr.bf16.mxu0 0
        %782 = vmatpush2.bf16.msra.mxu0 0
        %783 = vmatprep.subr.bf16.mxu0 0
        %784 = vmatpush2.bf16.msra.mxu0 0
        %785 = vmatprep.subr.bf16.mxu0 0
        %786 = vmatpush2.bf16.msra.mxu0 0
        %787 = vmatprep.subr.bf16.mxu0 0
        %788 = vmatpush2.bf16.msra.mxu0 0
        %789 = vmatprep.mubr.bf16.mxu0 0
        %790 = vmatmul.mubr.bf16.gmra.mxu0 %v751
        %v791 = vpop.f32.mrf.mxu0
        %v792 = vadd.f32 0.0, %v791
        %v793 = vpop.f32.mrf.mxu0
        %v794 = vpop.f32.mrf.mxu0
        %v795 = vpop.f32.mrf.mxu0
        %796 = vdwg.mxu0
        %v797 = vadd.f32 %v747, %v792
        %798 = vst.msk [vmem:[#allocation5] sm:$0xff] %vm562, %v797
        %799 = vst.msk [vmem:[#allocation3] sm:$0xff] %vm739, %v721
        %p800 = scmp.eq.s32.totalorder %s30, 2
        // Predicated region
        $region69: #{tpu_custom_call.1} parent=63 // pred_check
          %p801 = pneg %p800
        $region70: #{tpu_custom_call.1} parent=63 // pred_check_branch
          %803 = sbr.rel (%p801) target = $region72
        $region71: #{tpu_custom_call.1} parent=63 // pred_region
          %v804 = vld [vmem:[#allocation4] sm:$0xff]
          %v805 = vrcp.pop %v804
          %v806 = vld [vmem:[#allocation5] sm:$0xff]
          %808 = vset.pattern.permute.xlu0 0
          %809 = vperm.xlu0 %808, %v805
          %v810 = vpop.permute.xlu0 %809
          %v812 = vmul.f32 %v806, %v810
          %v813 = vld [vmem:[%s423] sm:$0xff]
          %v814 = vadd.f32 %v812, %v813
          %v815 = vpack.c.bf16 %v814, %v814
          %v816 = vld [vmem:[%s9] sm:$0xf]
          %v817 = vld [vmem:[%s9 + $0x4] sm:$0xf]
          %v818 = vld [vmem:[%s10] sm:$0x1]
          %v820 = vlaneseq
          %v821 = vshrl.u32 %v820, 7
          %v822 = vsub.s32 0, %v821
          %v823 = vrot.slane %v818, %v822
          %v827 = vunpack.c.l.b16 %v816
          %v828 = vunpack.c.l.b16 %v817
          %v829 = vpack.c.b16 %v828, %v827
          %v832 = vsel %vm562, %v815, 0
          %834 = vmatprep.subr.bf16.mxu0 0
          %835 = vmatpush1.bf16.msra.mxu0 0
          %836 = vmatprep.subr.bf16.mxu0 0
          %837 = vmatpush1.bf16.msra.mxu0 0
          %838 = vmatprep.subr.bf16.mxu0 0
          %839 = vmatpush1.bf16.msra.mxu0 0
          %840 = vmatprep.subr.bf16.mxu0 0
          %841 = vmatpush1.bf16.msra.mxu0 0
          %842 = vmatprep.subr.bf16.mxu0 0
          %843 = vmatpush1.bf16.msra.mxu0 0
          %844 = vmatprep.subr.bf16.mxu0 0
          %845 = vmatpush1.bf16.msra.mxu0 0
          %846 = vmatprep.subr.bf16.mxu0 0
          %847 = vmatpush1.bf16.msra.mxu0 0
          %848 = vmatprep.subr.bf16.mxu0 0
          %849 = vmatpush1.bf16.msra.mxu0 %v829
          %850 = vmatprep.subr.bf16.mxu0 0
          %851 = vmatpush2.bf16.msra.mxu0 0
          %852 = vmatprep.subr.bf16.mxu0 0
          %853 = vmatpush2.bf16.msra.mxu0 0
          %854 = vmatprep.subr.bf16.mxu0 0
          %855 = vmatpush2.bf16.msra.mxu0 0
          %856 = vmatprep.subr.bf16.mxu0 0
          %857 = vmatpush2.bf16.msra.mxu0 0
          %858 = vmatprep.subr.bf16.mxu0 0
          %859 = vmatpush2.bf16.msra.mxu0 0
          %860 = vmatprep.subr.bf16.mxu0 0
          %861 = vmatpush2.bf16.msra.mxu0 0
          %862 = vmatprep.subr.bf16.mxu0 0
          %863 = vmatpush2.bf16.msra.mxu0 0
          %864 = vmatprep.subr.bf16.mxu0 0
          %865 = vmatpush2.bf16.msra.mxu0 0
          %866 = vmatprep.mubr.bf16.mxu0 0
          %867 = vmatmul.mubr.bf16.gmra.mxu0 %v832
          %v868 = vpop.f32.mrf.mxu0
          %v869 = vadd.f32 %v823, %v868
          %v870 = vpop.f32.mrf.mxu0
          %v871 = vpop.f32.mrf.mxu0
          %v872 = vpop.f32.mrf.mxu0
          %873 = vdwg.mxu0
          %874 = vst [vmem:[%s415] sm:$0xff] %v869
        $region72: #{tpu_custom_call.1} parent=63 // pred_fallthru
          _
        %s875 = sand.u32 %s291, 1
        %s876 = scalar_lea.sflag [#allocation7], %s875
        %s877 = sand.u32 %s291, 1
        %s878 = smul.addr %s877, 8
        %s879 = scalar_lea.vmem [#allocation6], %s878
        // Predicated region
        $region73: #{tpu_custom_call.1} parent=63 // pred_check
          %p880 = pneg %p301
        $region74: #{tpu_custom_call.1} parent=63 // pred_check_branch
          %882 = sbr.rel (%p880) target = $region76
        $region75: #{tpu_custom_call.1} parent=63 // pred_region
          %s884 = ssub.s32 128, 128
          %885 = vsyncadd %s876, %s884
          %s886 = smul.addr %s29, 128
          %s887 = scalar_lea.hbm %s11, %s886
          %s889 = sshll.u32 %s879, 4
          %s890 = int_to_ptr.vmem [resolvable:$true] %s889
          %892 = dma.vmem_to_hbm [thread:$0]  %s890, 128, %s887, %s876
        $region76: #{tpu_custom_call.1} parent=63 // pred_fallthru
          _
      $region64: #{tpu_custom_call.1} parent=5 // pred_fallthru
        _
      %p893 = scmp.le.s32.totalorder 2, %s20
      // Predicated region
      $region77: #{tpu_custom_call.1} parent=5 // pred_check
        %p894 = pneg %p893
      $region78: #{tpu_custom_call.1} parent=5 // pred_check_branch
        %896 = sbr.rel (%p894) target = $region80
      $region79: #{tpu_custom_call.1} parent=5 // pred_region
        %s897 = ssub.s32 %s20, 2
        // Predicated region
        $region81: #{tpu_custom_call.1} parent=79 // pred_check
          %p898 = pneg %p307
        $region82: #{tpu_custom_call.1} parent=79 // pred_check_branch
          %900 = sbr.rel (%p898) target = $region84
        $region83: #{tpu_custom_call.1} parent=79 // pred_region
          %s901 = sand.u32 %s292, 1
          %s902 = scalar_lea.sflag [#allocation7], %s901
          %s903 = sand.u32 %s292, 1
          %s904 = smul.addr %s903, 8
          %s905 = scalar_lea.vmem [#allocation6], %s904
          %906 = dma.done %s902, 128
        $region84: #{tpu_custom_call.1} parent=79 // pred_fallthru
          _
      $region80: #{tpu_custom_call.1} parent=5 // pred_fallthru
        _
    $region6: #{tpu_custom_call.1} parent=1 // loop_footer
      %s24 = sadd.s32 1, %s20
    $region7: #{tpu_custom_call.1} parent=1 // loop_footer_branch
      %19 = sbr.rel target = $region3
    $region8: #{tpu_custom_call.1} parent=1 // loop_exit
      _
    %907 = vsyncpa [#allocation7], 1
    %s908 = scalar_lea.sflag [#allocation7], 1
    %909 = vsyncpa %s908, 1

</llo_original>
